<compile_context>
chip_gen: v6e
topology: v6e:2x2x1
jax: 0.10.0
libtpu: 0.0.40
codegen_flags: <defaults>
</compile_context>

<pallas_src>
import math
import jax
import jax.numpy as jnp
from jax import lax
from jax.experimental import pallas as pl
from jax.experimental.pallas import tpu as pltpu

_INV_SQRT2 = 1.0 / math.sqrt(2.0)


def _fusion_kernel(audio_ref, video_ref,
                   w1a_ref, w1v_ref, b1_ref,
                   w2_ref, b2_ref,
                   out_ref):
    # Temporal pooling.  1/Ta and 1/Tv are folded into w1a/w1v, so a plain sum
    # over the sequence axis implements the AdaptiveAvgPool1d(1).
    a = jnp.sum(audio_ref[...], axis=1).astype(jnp.bfloat16)   # (B, Da)
    v = jnp.sum(video_ref[...], axis=1).astype(jnp.bfloat16)   # (B, Dv)

    # Embeddings layer: concat([a, v]) @ W1 + b1 == a@W1a + v@W1v + b1.
    # bf16 operands, f32 accumulation on the MXU.
    h = (jnp.dot(a, w1a_ref[...], preferred_element_type=jnp.float32)
         + jnp.dot(v, w1v_ref[...], preferred_element_type=jnp.float32)
         + b1_ref[...])                                         # (B, 256) f32

    # Exact (erf-based) GELU — matches PyTorch nn.GELU default.
    h = 0.5 * h * (1.0 + lax.erf(h * _INV_SQRT2))

    # Output layer: C padded to 128 lanes -> unmasked lane-dense stores.
    o = (jnp.dot(h, w2_ref[...], preferred_element_type=jnp.float32)
         + b2_ref[...])                                         # (B, Cpad) f32

    # Fuse unsqueeze(1).repeat(1, R, 1) into the kernel store.
    out_ref[...] = jnp.broadcast_to(o[:, None, :], out_ref.shape).astype(out_ref.dtype)


def final_fusion_model_v4_forward(audio, video, params, *, repeat=20):
    """audio: (B, Ta, Da) f32, video: (B, Tv, Dv) f32 -> (B, repeat, C) f32."""
    B = audio.shape[0]
    c_pad = params["w2"].shape[1]
    C = params["num_classes"]
    hidden = params["w1a"].shape[1]

    flops = (2 * B * (params["w1a"].shape[0] + params["w1v"].shape[0]) * hidden
             + 2 * B * params["w2"].shape[0] * c_pad)
    bytes_accessed = (audio.size * audio.dtype.itemsize
                      + video.size * video.dtype.itemsize
                      + sum(params[k].size * params[k].dtype.itemsize
                            for k in ("w1a", "w1v", "b1", "w2", "b2"))
                      + B * repeat * c_pad * 4)

    vmem = pl.BlockSpec(memory_space=pltpu.MemorySpace.VMEM)
    out_pad = pl.pallas_call(
        _fusion_kernel,
        out_shape=jax.ShapeDtypeStruct((B, repeat, c_pad), jnp.float32),
        in_specs=[vmem] * 7,
        out_specs=vmem,
        cost_estimate=pl.CostEstimate(flops=flops,
                                      transcendentals=B * hidden,
                                      bytes_accessed=bytes_accessed),
    )(audio, video,
      params["w1a"], params["w1v"], params["b1"],
      params["w2"], params["b2"])

    # Drop the zero-padded lanes; only the real num_classes are user-visible.
    return out_pad[:, :, :C]


def init_raw_params(key, audio_feat=1024, video_feat=256, hidden=256, num_classes=8):
    """f32 master weights mimicking PyTorch nn.Linear init (uniform +/- 1/sqrt(fan_in))."""
    k1, k2, k3, k4 = jax.random.split(key, 4)
    fan1 = audio_feat + video_feat
    lim1 = 1.0 / math.sqrt(fan1)
    lim2 = 1.0 / math.sqrt(hidden)
    return {
        "w1": jax.random.uniform(k1, (fan1, hidden), jnp.float32, -lim1, lim1),
        "b1": jax.random.uniform(k2, (hidden,), jnp.float32, -lim1, lim1),
        "w2": jax.random.uniform(k3, (hidden, num_classes), jnp.float32, -lim2, lim2),
        "b2": jax.random.uniform(k4, (num_classes,), jnp.float32, -lim2, lim2),
    }


def prepare_params(raw, *, audio_shape=(4, 1024), video_shape=(20, 256), c_pad=128):
    """One-time host-side prep: fold pooling scales, cast W1 to bf16, pad W2/b2 to 128 lanes."""
    Ta, Da = audio_shape
    Tv, Dv = video_shape
    hidden = raw["w1"].shape[1]
    C = raw["w2"].shape[1]
    assert C <= c_pad
    w1a = (raw["w1"][:Da] * (1.0 / Ta)).astype(jnp.bfloat16)    # (Da, hidden) bf16
    w1v = (raw["w1"][Da:] * (1.0 / Tv)).astype(jnp.bfloat16)    # (Dv, hidden) bf16
    w2p = jnp.zeros((hidden, c_pad), jnp.float32).at[:, :C].set(raw["w2"])
    b2p = jnp.zeros((1, c_pad), jnp.float32).at[:, :C].set(raw["b2"])
    return {
        "w1a": w1a,
        "w1v": w1v,
        "b1": raw["b1"].reshape(1, hidden),                     # (1, hidden) f32
        "w2": w2p,                                              # (hidden, 128) f32
        "b2": b2p,                                              # (1, 128) f32
        "num_classes": C,
    }


if __name__ == "__main__":
    key = jax.random.PRNGKey(0)
    k_a, k_v, k_p = jax.random.split(key, 3)

    B = 2
    audio_shape = (4, 1024)     # module default (seq, feat)
    video_shape = (20, 256)     # module default (seq, feat)
    num_classes = 8

    audio = jax.random.normal(k_a, (B,) + audio_shape, jnp.float32)
    video = jax.random.normal(k_v, (B,) + video_shape, jnp.float32)

    raw = init_raw_params(k_p, audio_feat=audio_shape[1], video_feat=video_shape[1],
                          hidden=256, num_classes=num_classes)
    params = prepare_params(raw, audio_shape=audio_shape, video_shape=video_shape)

    out = final_fusion_model_v4_forward(audio, video, params, repeat=20)
    out = jax.block_until_ready(out)
    assert out.shape == (B, 20, num_classes), out.shape

    # Pure-JAX f32 reference of the PyTorch forward.
    a_pool = jnp.mean(audio, axis=1)
    v_pool = jnp.mean(video, axis=1)
    fused = jnp.concatenate([a_pool, v_pool], axis=-1)
    h = jax.nn.gelu(fused @ raw["w1"] + raw["b1"], approximate=False)
    ref2d = h @ raw["w2"] + raw["b2"]
    ref = jnp.broadcast_to(ref2d[:, None, :], (B, 20, num_classes))

    # bf16 first-layer weights (f32 accumulation) -> slightly loosened tolerance.
    err = float(jnp.max(jnp.abs(out - ref)))
    assert jnp.allclose(out, ref, atol=1e-2, rtol=1e-2), err

    print("KERNEL_OK")
</pallas_src>

<mosaic_0001>
module attributes {stable_mosaic.version = 11 : i64} {
  func.func @_fusion_kernel(%arg0: memref<2x4x1024xf32, #tpu.memory_space<vmem>>, %arg1: memref<2x20x256xf32, #tpu.memory_space<vmem>>, %arg2: memref<1024x256xbf16, #tpu.memory_space<vmem>>, %arg3: memref<256x256xbf16, #tpu.memory_space<vmem>>, %arg4: memref<1x256xf32, #tpu.memory_space<vmem>>, %arg5: memref<256x128xf32, #tpu.memory_space<vmem>>, %arg6: memref<1x128xf32, #tpu.memory_space<vmem>>, %arg7: memref<2x20x128xf32, #tpu.memory_space<vmem>>) attributes {dimension_semantics = [], scalar_prefetch = 0 : i64, scratch_operands = 0 : i64, tpu.core_type = #tpu.core_type<tc>} {
    %c0 = arith.constant 0 : index
    %c0_0 = arith.constant 0 : index
    %c0_1 = arith.constant 0 : index
    %0 = vector.load %arg0[%c0, %c0_0, %c0_1] : memref<2x4x1024xf32, #tpu.memory_space<vmem>>, vector<2x4x1024xf32>
    %cst = arith.constant dense<0.000000e+00> : vector<2x1024xf32>
    %1 = vector.multi_reduction <add>, %0, %cst [1] : vector<2x4x1024xf32> to vector<2x1024xf32>
    %2 = arith.truncf %1 : vector<2x1024xf32> to vector<2x1024xbf16>
    %c0_2 = arith.constant 0 : index
    %c0_3 = arith.constant 0 : index
    %c0_4 = arith.constant 0 : index
    %3 = vector.load %arg1[%c0_2, %c0_3, %c0_4] : memref<2x20x256xf32, #tpu.memory_space<vmem>>, vector<2x20x256xf32>
    %cst_5 = arith.constant dense<0.000000e+00> : vector<2x256xf32>
    %4 = vector.multi_reduction <add>, %3, %cst_5 [1] : vector<2x20x256xf32> to vector<2x256xf32>
    %5 = arith.truncf %4 : vector<2x256xf32> to vector<2x256xbf16>
    %c0_6 = arith.constant 0 : index
    %c0_7 = arith.constant 0 : index
    %6 = vector.load %arg2[%c0_6, %c0_7] : memref<1024x256xbf16, #tpu.memory_space<vmem>>, vector<1024x256xbf16>
    %cst_8 = arith.constant dense<0.000000e+00> : vector<2x256xf32>
    %7 = tpu.matmul %2, %6, %cst_8 {dimension_numbers = #tpu.dot_dimension_numbers<[1], [0], [0], [1], [0, 0, 1, 1], [], []>} : vector<2x1024xbf16>, vector<1024x256xbf16>, vector<2x256xf32> -> vector<2x256xf32>
    %c0_9 = arith.constant 0 : index
    %c0_10 = arith.constant 0 : index
    %8 = vector.load %arg3[%c0_9, %c0_10] : memref<256x256xbf16, #tpu.memory_space<vmem>>, vector<256x256xbf16>
    %cst_11 = arith.constant dense<0.000000e+00> : vector<2x256xf32>
    %9 = tpu.matmul %5, %8, %cst_11 {dimension_numbers = #tpu.dot_dimension_numbers<[1], [0], [0], [1], [0, 0, 1, 1], [], []>} : vector<2x256xbf16>, vector<256x256xbf16>, vector<2x256xf32> -> vector<2x256xf32>
    %10 = arith.addf %7, %9 : vector<2x256xf32>
    %c0_12 = arith.constant 0 : index
    %c0_13 = arith.constant 0 : index
    %11 = vector.load %arg4[%c0_12, %c0_13] : memref<1x256xf32, #tpu.memory_space<vmem>>, vector<1x256xf32>
    %12 = vector.broadcast %11 : vector<1x256xf32> to vector<2x256xf32>
    %13 = arith.addf %10, %12 : vector<2x256xf32>
    %cst_14 = arith.constant 5.000000e-01 : f32
    %14 = vector.broadcast %cst_14 : f32 to vector<2x256xf32>
    %15 = arith.mulf %14, %13 : vector<2x256xf32>
    %cst_15 = arith.constant 0.707106769 : f32
    %16 = vector.broadcast %cst_15 : f32 to vector<2x256xf32>
    %17 = arith.mulf %13, %16 : vector<2x256xf32>
    %18 = math.erf %17 : vector<2x256xf32>
    %cst_16 = arith.constant 1.000000e+00 : f32
    %19 = vector.broadcast %cst_16 : f32 to vector<2x256xf32>
    %20 = arith.addf %19, %18 : vector<2x256xf32>
    %21 = arith.mulf %15, %20 : vector<2x256xf32>
    %c0_17 = arith.constant 0 : index
    %c0_18 = arith.constant 0 : index
    %22 = vector.load %arg5[%c0_17, %c0_18] : memref<256x128xf32, #tpu.memory_space<vmem>>, vector<256x128xf32>
    %cst_19 = arith.constant dense<0.000000e+00> : vector<2x128xf32>
    %23 = tpu.matmul %21, %22, %cst_19 {dimension_numbers = #tpu.dot_dimension_numbers<[1], [0], [0], [1], [0, 0, 1, 1], [], []>} : vector<2x256xf32>, vector<256x128xf32>, vector<2x128xf32> -> vector<2x128xf32>
    %c0_20 = arith.constant 0 : index
    %c0_21 = arith.constant 0 : index
    %24 = vector.load %arg6[%c0_20, %c0_21] : memref<1x128xf32, #tpu.memory_space<vmem>>, vector<1x128xf32>
    %25 = vector.broadcast %24 : vector<1x128xf32> to vector<2x128xf32>
    %26 = arith.addf %23, %25 : vector<2x128xf32>
    %27 = vector.shape_cast %26 : vector<2x128xf32> to vector<2x1x128xf32>
    %28 = vector.shape_cast %27 : vector<2x1x128xf32> to vector<2x1x128xf32>
    %29 = vector.broadcast %28 : vector<2x1x128xf32> to vector<2x20x128xf32>
    %c0_22 = arith.constant 0 : index
    %c0_23 = arith.constant 0 : index
    %c0_24 = arith.constant 0 : index
    %30 = vector.load %arg7[%c0_22, %c0_23, %c0_24] : memref<2x20x128xf32, #tpu.memory_space<vmem>>, vector<2x20x128xf32>
    tpu.vector_store %arg7[%c0_22, %c0_23, %c0_24], %29 {strides = array<i32>} : memref<2x20x128xf32, #tpu.memory_space<vmem>>, vector<2x20x128xf32>,
    return
  }
}

</mosaic_0001>

<llo_original>
// kernel: tpu_custom_call.1
$region0: #{tpu_custom_call.1}
  #allocation0 [shape = 'u32[]', space=smem, size = 0x4, offset = 0x4, fixed_abs, tag = 'smem constant byte address 0x4 - core index']
  #allocation1 [shape = 'u32[144,128]{1,0:T(1,128)}', space=vmem, size = 0x12000, scoped, tag = 'internal scratch']
  %s0 = inlined_call_operand.vmem [shape: f32[2,4,1024], index: 0, kind: input, shape index: {}]
  %s1 = inlined_call_operand.vmem [shape: f32[2,20,256], index: 1, kind: input, shape index: {}]
  %s2 = inlined_call_operand.hbm [shape: bf16[1024,256], index: 2, kind: input, shape index: {}]
  %s3 = inlined_call_operand.hbm [shape: bf16[256,256], index: 3, kind: input, shape index: {}]
  %s4 = inlined_call_operand.vmem [shape: f32[1,256], index: 4, kind: input, shape index: {}]
  %s5 = inlined_call_operand.hbm [shape: f32[256,128], index: 5, kind: input, shape index: {}]
  %s6 = inlined_call_operand.vmem [shape: f32[1,128], index: 6, kind: input, shape index: {}]
  %s7 = inlined_call_operand.vmem [shape: f32[2,20,128], index: 7, kind: output, shape index: {}]
  %s8 = sld [smem:[#allocation0]]
  $region50: #{tpu_custom_call.1} parent=0
    _
  %s10 = ssub.s32 1, %s8
  %s11 = scalar_select 0, %s10, %s8
  $region1: #{tpu_custom_call.1} parent=0
    #allocation2 [shape = 'u8[524288]{0}', space=vmem, size = 0x80000, scoped, tag = 'input window, operand 2, single buffered']
    #allocation3 [shape = 's32[1]{0}', space=sflag, size = 0x4, scoped, tag = 'scoped memory for tpu_custom_call.1']
    #allocation4 [shape = 'u8[131072]{0}', space=vmem, size = 0x20000, scoped, tag = 'input window, operand 3, single buffered']
    #allocation5 [shape = 's32[1]{0}', space=sflag, size = 0x4, scoped, tag = 'scoped memory for tpu_custom_call.1']
    #allocation6 [shape = 'u8[131072]{0}', space=vmem, size = 0x20000, scoped, tag = 'input window, operand 5, single buffered']
    %12 = vsyncpa [#allocation3], 0
    %13 = vsyncpa [#allocation5], 0
    // Predicated region
    $region2: #{tpu_custom_call.1} parent=1 // pred_check
      _
    $region3: #{tpu_custom_call.1} parent=1 // pred_check_branch
      %15 = sbr.rel (0) target = $region5
    $region4: #{tpu_custom_call.1} parent=1 // pred_region
      _
    $region5: #{tpu_custom_call.1} parent=1 // pred_fallthru
      _
    // Predicated region
    $region6: #{tpu_custom_call.1} parent=1 // pred_check
      _
    $region7: #{tpu_custom_call.1} parent=1 // pred_check_branch
      %17 = sbr.rel (0) target = $region9
    $region8: #{tpu_custom_call.1} parent=1 // pred_region
      _
    $region9: #{tpu_custom_call.1} parent=1 // pred_fallthru
      _
    // Predicated region
    $region10: #{tpu_custom_call.1} parent=1 // pred_check
      _
    $region11: #{tpu_custom_call.1} parent=1 // pred_check_branch
      %19 = sbr.rel (0) target = $region13
    $region12: #{tpu_custom_call.1} parent=1 // pred_region
      %s21 = ssub.s32 16384, 16384
      %22 = vsyncadd [#allocation3], %s21
      %s23 = sshll.u32 [#allocation2], 4
      %s24 = int_to_ptr.vmem [resolvable:$true] %s23
      %29 = dma.hbm_to_vmem [thread:$0]  %s2, 16384, %s24, [#allocation3], 128, 128, 8
    $region13: #{tpu_custom_call.1} parent=1 // pred_fallthru
      _
    // Predicated region
    $region14: #{tpu_custom_call.1} parent=1 // pred_check
      _
    $region15: #{tpu_custom_call.1} parent=1 // pred_check_branch
      %31 = sbr.rel (0) target = $region17
    $region16: #{tpu_custom_call.1} parent=1 // pred_region
      %s33 = ssub.s32 4096, 4096
      %34 = vsyncadd [#allocation5], %s33
      %s35 = sshll.u32 [#allocation4], 4
      %s36 = int_to_ptr.vmem [resolvable:$true] %s35
      %41 = dma.hbm_to_vmem [thread:$0]  %s3, 4096, %s36, [#allocation5], 128, 128, 8
    $region17: #{tpu_custom_call.1} parent=1 // pred_fallthru
      _
    // Predicated region
    $region18: #{tpu_custom_call.1} parent=1 // pred_check
      _
    $region19: #{tpu_custom_call.1} parent=1 // pred_check_branch
      %43 = sbr.rel (0) target = $region21
    $region20: #{tpu_custom_call.1} parent=1 // pred_region
      _
    $region21: #{tpu_custom_call.1} parent=1 // pred_fallthru
      _
    // Predicated region
    $region22: #{tpu_custom_call.1} parent=1 // pred_check
      _
    $region23: #{tpu_custom_call.1} parent=1 // pred_check_branch
      %45 = sbr.rel (0) target = $region25
    $region24: #{tpu_custom_call.1} parent=1 // pred_region
      %s47 = ssub.s32 4096, 4096
      %48 = vsyncadd [#allocation5], %s47
      %s49 = sshll.u32 [#allocation6], 4
      %s50 = int_to_ptr.vmem [resolvable:$true] %s49
      %55 = dma.hbm_to_vmem [thread:$0]  %s5, 4096, %s50, [#allocation5], 128, 128, 8
    $region25: #{tpu_custom_call.1} parent=1 // pred_fallthru
      _
    // Predicated region
    $region26: #{tpu_custom_call.1} parent=1 // pred_check
      _
    $region27: #{tpu_custom_call.1} parent=1 // pred_check_branch
      %57 = sbr.rel (0) target = $region29
    $region28: #{tpu_custom_call.1} parent=1 // pred_region
      _
    $region29: #{tpu_custom_call.1} parent=1 // pred_fallthru
      _
    // Predicated region
    $region30: #{tpu_custom_call.1} parent=1 // pred_check
      _
    $region31: #{tpu_custom_call.1} parent=1 // pred_check_branch
      %59 = sbr.rel (0) target = $region33
    $region32: #{tpu_custom_call.1} parent=1 // pred_region
      %60 = dma.done [#allocation3], 16384
    $region33: #{tpu_custom_call.1} parent=1 // pred_fallthru
      _
    // Predicated region
    $region34: #{tpu_custom_call.1} parent=1 // pred_check
      _
    $region35: #{tpu_custom_call.1} parent=1 // pred_check_branch
      %62 = sbr.rel (0) target = $region37
    $region36: #{tpu_custom_call.1} parent=1 // pred_region
      %63 = dma.done [#allocation5], 4096
    $region37: #{tpu_custom_call.1} parent=1 // pred_fallthru
      _
    // Predicated region
    $region38: #{tpu_custom_call.1} parent=1 // pred_check
      _
    $region39: #{tpu_custom_call.1} parent=1 // pred_check_branch
      %65 = sbr.rel (0) target = $region41
    $region40: #{tpu_custom_call.1} parent=1 // pred_region
      %66 = dma.done [#allocation5], 4096
    $region41: #{tpu_custom_call.1} parent=1 // pred_fallthru
      _
    %v67 = vld [vmem:[%s0] sm:$0xff]
    %v68 = vld [vmem:[%s0 + $0x8] sm:$0xff]
    %v69 = vld [vmem:[%s0 + $0x10] sm:$0xff]
    %v70 = vld [vmem:[%s0 + $0x18] sm:$0xff]
    %v71 = vld [vmem:[%s0 + $0x20] sm:$0xff]
    %v72 = vld [vmem:[%s0 + $0x28] sm:$0xff]
    %v73 = vld [vmem:[%s0 + $0x30] sm:$0xff]
    %v74 = vld [vmem:[%s0 + $0x38] sm:$0xff]
    %v83 = vcombine.high %v67, %v67
    %v84 = vcombine.high %v68, %v68
    %v85 = vcombine.high %v69, %v69
    %v86 = vcombine.high %v70, %v70
    %v87 = vcombine.high %v71, %v71
    %v88 = vcombine.high %v72, %v72
    %v89 = vcombine.high %v73, %v73
    %v90 = vcombine.high %v74, %v74
    %vm99 = vcmask 1043456
    %v100 = vsel %vm99, %v67, 0.0
    %v101 = vrot.slane %v100, 4
    %v102 = vadd.f32 %v100, %v101
    %v103 = vrot.slane %v102, 2
    %v104 = vadd.f32 %v102, %v103
    %v105 = vrot.slane %v104, 1
    %v106 = vadd.f32 %v104, %v105
    %v107 = vsel %vm99, %v83, 0.0
    %v108 = vrot.slane %v107, 4
    %v109 = vadd.f32 %v107, %v108
    %v110 = vrot.slane %v109, 2
    %v111 = vadd.f32 %v109, %v110
    %v112 = vrot.slane %v111, 1
    %v113 = vadd.f32 %v111, %v112
    %v114 = vsel %vm99, %v68, 0.0
    %v115 = vrot.slane %v114, 4
    %v116 = vadd.f32 %v114, %v115
    %v117 = vrot.slane %v116, 2
    %v118 = vadd.f32 %v116, %v117
    %v119 = vrot.slane %v118, 1
    %v120 = vadd.f32 %v118, %v119
    %v121 = vsel %vm99, %v84, 0.0
    %v122 = vrot.slane %v121, 4
    %v123 = vadd.f32 %v121, %v122
    %v124 = vrot.slane %v123, 2
    %v125 = vadd.f32 %v123, %v124
    %v126 = vrot.slane %v125, 1
    %v127 = vadd.f32 %v125, %v126
    %v128 = vsel %vm99, %v69, 0.0
    %v129 = vrot.slane %v128, 4
    %v130 = vadd.f32 %v128, %v129
    %v131 = vrot.slane %v130, 2
    %v132 = vadd.f32 %v130, %v131
    %v133 = vrot.slane %v132, 1
    %v134 = vadd.f32 %v132, %v133
    %v135 = vsel %vm99, %v85, 0.0
    %v136 = vrot.slane %v135, 4
    %v137 = vadd.f32 %v135, %v136
    %v138 = vrot.slane %v137, 2
    %v139 = vadd.f32 %v137, %v138
    %v140 = vrot.slane %v139, 1
    %v141 = vadd.f32 %v139, %v140
    %v142 = vsel %vm99, %v70, 0.0
    %v143 = vrot.slane %v142, 4
    %v144 = vadd.f32 %v142, %v143
    %v145 = vrot.slane %v144, 2
    %v146 = vadd.f32 %v144, %v145
    %v147 = vrot.slane %v146, 1
    %v148 = vadd.f32 %v146, %v147
    %v149 = vsel %vm99, %v86, 0.0
    %v150 = vrot.slane %v149, 4
    %v151 = vadd.f32 %v149, %v150
    %v152 = vrot.slane %v151, 2
    %v153 = vadd.f32 %v151, %v152
    %v154 = vrot.slane %v153, 1
    %v155 = vadd.f32 %v153, %v154
    %v156 = vsel %vm99, %v71, 0.0
    %v157 = vrot.slane %v156, 4
    %v158 = vadd.f32 %v156, %v157
    %v159 = vrot.slane %v158, 2
    %v160 = vadd.f32 %v158, %v159
    %v161 = vrot.slane %v160, 1
    %v162 = vadd.f32 %v160, %v161
    %v163 = vsel %vm99, %v87, 0.0
    %v164 = vrot.slane %v163, 4
    %v165 = vadd.f32 %v163, %v164
    %v166 = vrot.slane %v165, 2
    %v167 = vadd.f32 %v165, %v166
    %v168 = vrot.slane %v167, 1
    %v169 = vadd.f32 %v167, %v168
    %v170 = vsel %vm99, %v72, 0.0
    %v171 = vrot.slane %v170, 4
    %v172 = vadd.f32 %v170, %v171
    %v173 = vrot.slane %v172, 2
    %v174 = vadd.f32 %v172, %v173
    %v175 = vrot.slane %v174, 1
    %v176 = vadd.f32 %v174, %v175
    %v177 = vsel %vm99, %v88, 0.0
    %v178 = vrot.slane %v177, 4
    %v179 = vadd.f32 %v177, %v178
    %v180 = vrot.slane %v179, 2
    %v181 = vadd.f32 %v179, %v180
    %v182 = vrot.slane %v181, 1
    %v183 = vadd.f32 %v181, %v182
    %v184 = vsel %vm99, %v73, 0.0
    %v185 = vrot.slane %v184, 4
    %v186 = vadd.f32 %v184, %v185
    %v187 = vrot.slane %v186, 2
    %v188 = vadd.f32 %v186, %v187
    %v189 = vrot.slane %v188, 1
    %v190 = vadd.f32 %v188, %v189
    %v191 = vsel %vm99, %v89, 0.0
    %v192 = vrot.slane %v191, 4
    %v193 = vadd.f32 %v191, %v192
    %v194 = vrot.slane %v193, 2
    %v195 = vadd.f32 %v193, %v194
    %v196 = vrot.slane %v195, 1
    %v197 = vadd.f32 %v195, %v196
    %v198 = vsel %vm99, %v74, 0.0
    %v199 = vrot.slane %v198, 4
    %v200 = vadd.f32 %v198, %v199
    %v201 = vrot.slane %v200, 2
    %v202 = vadd.f32 %v200, %v201
    %v203 = vrot.slane %v202, 1
    %v204 = vadd.f32 %v202, %v203
    %v205 = vsel %vm99, %v90, 0.0
    %v206 = vrot.slane %v205, 4
    %v207 = vadd.f32 %v205, %v206
    %v208 = vrot.slane %v207, 2
    %v209 = vadd.f32 %v207, %v208
    %v210 = vrot.slane %v209, 1
    %v211 = vadd.f32 %v209, %v210
    %v212 = vpack.c.bf16 %v106, %v106
    %v213 = vpack.c.bf16 %v113, %v113
    %v214 = vpack.c.bf16 %v120, %v120
    %v215 = vpack.c.bf16 %v127, %v127
    %v216 = vpack.c.bf16 %v134, %v134
    %v217 = vpack.c.bf16 %v141, %v141
    %v218 = vpack.c.bf16 %v148, %v148
    %v219 = vpack.c.bf16 %v155, %v155
    %v220 = vpack.c.bf16 %v162, %v162
    %v221 = vpack.c.bf16 %v169, %v169
    %v222 = vpack.c.bf16 %v176, %v176
    %v223 = vpack.c.bf16 %v183, %v183
    %v224 = vpack.c.bf16 %v190, %v190
    %v225 = vpack.c.bf16 %v197, %v197
    %v226 = vpack.c.bf16 %v204, %v204
    %v227 = vpack.c.bf16 %v211, %v211
    %v228 = vld [vmem:[%s1] sm:$0xff]
    %v229 = vld [vmem:[%s1 + $0x8] sm:$0xff]
    %v230 = vld [vmem:[%s1 + $0x10] sm:$0xff]
    %v231 = vld [vmem:[%s1 + $0x18] sm:$0xff]
    %v232 = vld [vmem:[%s1 + $0x20] sm:$0xf]
    %v233 = vld [vmem:[%s1 + $0x28] sm:$0xf]
    %v234 = vld [vmem:[%s1 + $0x30] sm:$0xff]
    %v235 = vld [vmem:[%s1 + $0x38] sm:$0xff]
    %v236 = vld [vmem:[%s1 + $0x40] sm:$0xff]
    %v237 = vld [vmem:[%s1 + $0x48] sm:$0xff]
    %v238 = vld [vmem:[%s1 + $0x50] sm:$0xf]
    %v239 = vld [vmem:[%s1 + $0x58] sm:$0xf]
    %v240 = vadd.f32 %v228, %v230
    %v241 = vsel %vm99, %v232, 0.0
    %v242 = vadd.f32 %v240, %v241
    %v243 = vrot.slane %v242, 4
    %v244 = vadd.f32 %v242, %v243
    %v245 = vrot.slane %v244, 2
    %v246 = vadd.f32 %v244, %v245
    %v247 = vrot.slane %v246, 1
    %v248 = vadd.f32 %v246, %v247
    %v249 = vadd.f32 %v229, %v231
    %v250 = vsel %vm99, %v233, 0.0
    %v251 = vadd.f32 %v249, %v250
    %v252 = vrot.slane %v251, 4
    %v253 = vadd.f32 %v251, %v252
    %v254 = vrot.slane %v253, 2
    %v255 = vadd.f32 %v253, %v254
    %v256 = vrot.slane %v255, 1
    %v257 = vadd.f32 %v255, %v256
    %v258 = vadd.f32 %v234, %v236
    %v259 = vsel %vm99, %v238, 0.0
    %v260 = vadd.f32 %v258, %v259
    %v261 = vrot.slane %v260, 4
    %v262 = vadd.f32 %v260, %v261
    %v263 = vrot.slane %v262, 2
    %v264 = vadd.f32 %v262, %v263
    %v265 = vrot.slane %v264, 1
    %v266 = vadd.f32 %v264, %v265
    %v267 = vadd.f32 %v235, %v237
    %v268 = vsel %vm99, %v239, 0.0
    %v269 = vadd.f32 %v267, %v268
    %v270 = vrot.slane %v269, 4
    %v271 = vadd.f32 %v269, %v270
    %v272 = vrot.slane %v271, 2
    %v273 = vadd.f32 %v271, %v272
    %v274 = vrot.slane %v273, 1
    %v275 = vadd.f32 %v273, %v274
    %v276 = vpack.c.bf16 %v248, %v248
    %v277 = vpack.c.bf16 %v257, %v257
    %v278 = vpack.c.bf16 %v266, %v266
    %v279 = vpack.c.bf16 %v275, %v275
    %v280 = vld [vmem:[#allocation2] sm:$0xff]
    %v281 = vld [vmem:[#allocation2 + $0x8] sm:$0xff]
    %v282 = vld [vmem:[#allocation2 + $0x10] sm:$0xff]
    %v283 = vld [vmem:[#allocation2 + $0x18] sm:$0xff]
    %v284 = vld [vmem:[#allocation2 + $0x20] sm:$0xff]
    %v285 = vld [vmem:[#allocation2 + $0x28] sm:$0xff]
    %v286 = vld [vmem:[#allocation2 + $0x30] sm:$0xff]
    %v287 = vld [vmem:[#allocation2 + $0x38] sm:$0xff]
    %v288 = vld [vmem:[#allocation2 + $0x40] sm:$0xff]
    %v289 = vld [vmem:[#allocation2 + $0x48] sm:$0xff]
    %v290 = vld [vmem:[#allocation2 + $0x50] sm:$0xff]
    %v291 = vld [vmem:[#allocation2 + $0x58] sm:$0xff]
    %v292 = vld [vmem:[#allocation2 + $0x60] sm:$0xff]
    %v293 = vld [vmem:[#allocation2 + $0x68] sm:$0xff]
    %v294 = vld [vmem:[#allocation2 + $0x70] sm:$0xff]
    %v295 = vld [vmem:[#allocation2 + $0x78] sm:$0xff]
    %v296 = vld [vmem:[#allocation2 + $0x80] sm:$0xff]
    %v297 = vld [vmem:[#allocation2 + $0x88] sm:$0xff]
    %v298 = vld [vmem:[#allocation2 + $0x90] sm:$0xff]
    %v299 = vld [vmem:[#allocation2 + $0x98] sm:$0xff]
    %v300 = vld [vmem:[#allocation2 + $0xa0] sm:$0xff]
    %v301 = vld [vmem:[#allocation2 + $0xa8] sm:$0xff]
    %v302 = vld [vmem:[#allocation2 + $0xb0] sm:$0xff]
    %v303 = vld [vmem:[#allocation2 + $0xb8] sm:$0xff]
    %v304 = vld [vmem:[#allocation2 + $0xc0] sm:$0xff]
    %v305 = vld [vmem:[#allocation2 + $0xc8] sm:$0xff]
    %v306 = vld [vmem:[#allocation2 + $0xd0] sm:$0xff]
    %v307 = vld [vmem:[#allocation2 + $0xd8] sm:$0xff]
    %v308 = vld [vmem:[#allocation2 + $0xe0] sm:$0xff]
    %v309 = vld [vmem:[#allocation2 + $0xe8] sm:$0xff]
    %v310 = vld [vmem:[#allocation2 + $0xf0] sm:$0xff]
    %v311 = vld [vmem:[#allocation2 + $0xf8] sm:$0xff]
    %v312 = vld [vmem:[#allocation2 + $0x100] sm:$0xff]
    %v313 = vld [vmem:[#allocation2 + $0x108] sm:$0xff]
    %v314 = vld [vmem:[#allocation2 + $0x110] sm:$0xff]
    %v315 = vld [vmem:[#allocation2 + $0x118] sm:$0xff]
    %v316 = vld [vmem:[#allocation2 + $0x120] sm:$0xff]
    %v317 = vld [vmem:[#allocation2 + $0x128] sm:$0xff]
    %v318 = vld [vmem:[#allocation2 + $0x130] sm:$0xff]
    %v319 = vld [vmem:[#allocation2 + $0x138] sm:$0xff]
    %v320 = vld [vmem:[#allocation2 + $0x140] sm:$0xff]
    %v321 = vld [vmem:[#allocation2 + $0x148] sm:$0xff]
    %v322 = vld [vmem:[#allocation2 + $0x150] sm:$0xff]
    %v323 = vld [vmem:[#allocation2 + $0x158] sm:$0xff]
    %v324 = vld [vmem:[#allocation2 + $0x160] sm:$0xff]
    %v325 = vld [vmem:[#allocation2 + $0x168] sm:$0xff]
    %v326 = vld [vmem:[#allocation2 + $0x170] sm:$0xff]
    %v327 = vld [vmem:[#allocation2 + $0x178] sm:$0xff]
    %v328 = vld [vmem:[#allocation2 + $0x180] sm:$0xff]
    %v329 = vld [vmem:[#allocation2 + $0x188] sm:$0xff]
    %v330 = vld [vmem:[#allocation2 + $0x190] sm:$0xff]
    %v331 = vld [vmem:[#allocation2 + $0x198] sm:$0xff]
    %v332 = vld [vmem:[#allocation2 + $0x1a0] sm:$0xff]
    %v333 = vld [vmem:[#allocation2 + $0x1a8] sm:$0xff]
    %v334 = vld [vmem:[#allocation2 + $0x1b0] sm:$0xff]
    %v335 = vld [vmem:[#allocation2 + $0x1b8] sm:$0xff]
    %v336 = vld [vmem:[#allocation2 + $0x1c0] sm:$0xff]
    %v337 = vld [vmem:[#allocation2 + $0x1c8] sm:$0xff]
    %v338 = vld [vmem:[#allocation2 + $0x1d0] sm:$0xff]
    %v339 = vld [vmem:[#allocation2 + $0x1d8] sm:$0xff]
    %v340 = vld [vmem:[#allocation2 + $0x1e0] sm:$0xff]
    %v341 = vld [vmem:[#allocation2 + $0x1e8] sm:$0xff]
    %v342 = vld [vmem:[#allocation2 + $0x1f0] sm:$0xff]
    %v343 = vld [vmem:[#allocation2 + $0x1f8] sm:$0xff]
    %v344 = vld [vmem:[#allocation2 + $0x200] sm:$0xff]
    %v345 = vld [vmem:[#allocation2 + $0x208] sm:$0xff]
    %v346 = vld [vmem:[#allocation2 + $0x210] sm:$0xff]
    %v347 = vld [vmem:[#allocation2 + $0x218] sm:$0xff]
    %v348 = vld [vmem:[#allocation2 + $0x220] sm:$0xff]
    %v349 = vld [vmem:[#allocation2 + $0x228] sm:$0xff]
    %v350 = vld [vmem:[#allocation2 + $0x230] sm:$0xff]
    %v351 = vld [vmem:[#allocation2 + $0x238] sm:$0xff]
    %v352 = vld [vmem:[#allocation2 + $0x240] sm:$0xff]
    %v353 = vld [vmem:[#allocation2 + $0x248] sm:$0xff]
    %v354 = vld [vmem:[#allocation2 + $0x250] sm:$0xff]
    %v355 = vld [vmem:[#allocation2 + $0x258] sm:$0xff]
    %v356 = vld [vmem:[#allocation2 + $0x260] sm:$0xff]
    %v357 = vld [vmem:[#allocation2 + $0x268] sm:$0xff]
    %v358 = vld [vmem:[#allocation2 + $0x270] sm:$0xff]
    %v359 = vld [vmem:[#allocation2 + $0x278] sm:$0xff]
    %v360 = vld [vmem:[#allocation2 + $0x280] sm:$0xff]
    %v361 = vld [vmem:[#allocation2 + $0x288] sm:$0xff]
    %v362 = vld [vmem:[#allocation2 + $0x290] sm:$0xff]
    %v363 = vld [vmem:[#allocation2 + $0x298] sm:$0xff]
    %v364 = vld [vmem:[#allocation2 + $0x2a0] sm:$0xff]
    %v365 = vld [vmem:[#allocation2 + $0x2a8] sm:$0xff]
    %v366 = vld [vmem:[#allocation2 + $0x2b0] sm:$0xff]
    %v367 = vld [vmem:[#allocation2 + $0x2b8] sm:$0xff]
    %v368 = vld [vmem:[#allocation2 + $0x2c0] sm:$0xff]
    %v369 = vld [vmem:[#allocation2 + $0x2c8] sm:$0xff]
    %v370 = vld [vmem:[#allocation2 + $0x2d0] sm:$0xff]
    %v371 = vld [vmem:[#allocation2 + $0x2d8] sm:$0xff]
    %v372 = vld [vmem:[#allocation2 + $0x2e0] sm:$0xff]
    %v373 = vld [vmem:[#allocation2 + $0x2e8] sm:$0xff]
    %v374 = vld [vmem:[#allocation2 + $0x2f0] sm:$0xff]
    %v375 = vld [vmem:[#allocation2 + $0x2f8] sm:$0xff]
    %v376 = vld [vmem:[#allocation2 + $0x300] sm:$0xff]
    %v377 = vld [vmem:[#allocation2 + $0x308] sm:$0xff]
    %v378 = vld [vmem:[#allocation2 + $0x310] sm:$0xff]
    %v379 = vld [vmem:[#allocation2 + $0x318] sm:$0xff]
    %v380 = vld [vmem:[#allocation2 + $0x320] sm:$0xff]
    %v381 = vld [vmem:[#allocation2 + $0x328] sm:$0xff]
    %v382 = vld [vmem:[#allocation2 + $0x330] sm:$0xff]
    %v383 = vld [vmem:[#allocation2 + $0x338] sm:$0xff]
    %v384 = vld [vmem:[#allocation2 + $0x340] sm:$0xff]
    %v385 = vld [vmem:[#allocation2 + $0x348] sm:$0xff]
    %v386 = vld [vmem:[#allocation2 + $0x350] sm:$0xff]
    %v387 = vld [vmem:[#allocation2 + $0x358] sm:$0xff]
    %v388 = vld [vmem:[#allocation2 + $0x360] sm:$0xff]
    %v389 = vld [vmem:[#allocation2 + $0x368] sm:$0xff]
    %v390 = vld [vmem:[#allocation2 + $0x370] sm:$0xff]
    %v391 = vld [vmem:[#allocation2 + $0x378] sm:$0xff]
    %v392 = vld [vmem:[#allocation2 + $0x380] sm:$0xff]
    %v393 = vld [vmem:[#allocation2 + $0x388] sm:$0xff]
    %v394 = vld [vmem:[#allocation2 + $0x390] sm:$0xff]
    %v395 = vld [vmem:[#allocation2 + $0x398] sm:$0xff]
    %v396 = vld [vmem:[#allocation2 + $0x3a0] sm:$0xff]
    %v397 = vld [vmem:[#allocation2 + $0x3a8] sm:$0xff]
    %v398 = vld [vmem:[#allocation2 + $0x3b0] sm:$0xff]
    %v399 = vld [vmem:[#allocation2 + $0x3b8] sm:$0xff]
    %v400 = vld [vmem:[#allocation2 + $0x3c0] sm:$0xff]
    %v401 = vld [vmem:[#allocation2 + $0x3c8] sm:$0xff]
    %v402 = vld [vmem:[#allocation2 + $0x3d0] sm:$0xff]
    %v403 = vld [vmem:[#allocation2 + $0x3d8] sm:$0xff]
    %v404 = vld [vmem:[#allocation2 + $0x3e0] sm:$0xff]
    %v405 = vld [vmem:[#allocation2 + $0x3e8] sm:$0xff]
    %v406 = vld [vmem:[#allocation2 + $0x3f0] sm:$0xff]
    %v407 = vld [vmem:[#allocation2 + $0x3f8] sm:$0xff]
    %v408 = vld [vmem:[#allocation4] sm:$0xff]
    %v409 = vld [vmem:[#allocation4 + $0x8] sm:$0xff]
    %v410 = vld [vmem:[#allocation4 + $0x10] sm:$0xff]
    %v411 = vld [vmem:[#allocation4 + $0x18] sm:$0xff]
    %v412 = vld [vmem:[#allocation4 + $0x20] sm:$0xff]
    %v413 = vld [vmem:[#allocation4 + $0x28] sm:$0xff]
    %v414 = vld [vmem:[#allocation4 + $0x30] sm:$0xff]
    %v415 = vld [vmem:[#allocation4 + $0x38] sm:$0xff]
    %v416 = vld [vmem:[#allocation4 + $0x40] sm:$0xff]
    %v417 = vld [vmem:[#allocation4 + $0x48] sm:$0xff]
    %v418 = vld [vmem:[#allocation4 + $0x50] sm:$0xff]
    %v419 = vld [vmem:[#allocation4 + $0x58] sm:$0xff]
    %v420 = vld [vmem:[#allocation4 + $0x60] sm:$0xff]
    %v421 = vld [vmem:[#allocation4 + $0x68] sm:$0xff]
    %v422 = vld [vmem:[#allocation4 + $0x70] sm:$0xff]
    %v423 = vld [vmem:[#allocation4 + $0x78] sm:$0xff]
    %v424 = vld [vmem:[#allocation4 + $0x80] sm:$0xff]
    %v425 = vld [vmem:[#allocation4 + $0x88] sm:$0xff]
    %v426 = vld [vmem:[#allocation4 + $0x90] sm:$0xff]
    %v427 = vld [vmem:[#allocation4 + $0x98] sm:$0xff]
    %v428 = vld [vmem:[#allocation4 + $0xa0] sm:$0xff]
    %v429 = vld [vmem:[#allocation4 + $0xa8] sm:$0xff]
    %v430 = vld [vmem:[#allocation4 + $0xb0] sm:$0xff]
    %v431 = vld [vmem:[#allocation4 + $0xb8] sm:$0xff]
    %v432 = vld [vmem:[#allocation4 + $0xc0] sm:$0xff]
    %v433 = vld [vmem:[#allocation4 + $0xc8] sm:$0xff]
    %v434 = vld [vmem:[#allocation4 + $0xd0] sm:$0xff]
    %v435 = vld [vmem:[#allocation4 + $0xd8] sm:$0xff]
    %v436 = vld [vmem:[#allocation4 + $0xe0] sm:$0xff]
    %v437 = vld [vmem:[#allocation4 + $0xe8] sm:$0xff]
    %v438 = vld [vmem:[#allocation4 + $0xf0] sm:$0xff]
    %v439 = vld [vmem:[#allocation4 + $0xf8] sm:$0xff]
    %v444 = vunpack.c.l.b16 %v276
    %v445 = vunpack.c.l.b16 %v277
    %v446 = vunpack.c.l.b16 %v278
    %v447 = vunpack.c.l.b16 %v279
    %vm448 = vcmask 1041409
    %v449 = vsel %vm448, %v446, %v444
    %v450 = vsel %vm448, %v447, %v445
    %v451 = vpack.c.b16 %v449, %v449
    %v452 = vpack.c.b16 %v450, %v450
    %v487 = vunpack.c.l.b16 %v408
    %v488 = vunpack.c.h.b16 %v408
    %v489 = vunpack.c.l.b16 %v409
    %v490 = vunpack.c.h.b16 %v409
    %v491 = vunpack.c.l.b16 %v410
    %v492 = vunpack.c.h.b16 %v410
    %v493 = vunpack.c.l.b16 %v411
    %v494 = vunpack.c.h.b16 %v411
    %v495 = vunpack.c.l.b16 %v412
    %v496 = vunpack.c.h.b16 %v412
    %v497 = vunpack.c.l.b16 %v413
    %v498 = vunpack.c.h.b16 %v413
    %v499 = vunpack.c.l.b16 %v414
    %v500 = vunpack.c.h.b16 %v414
    %v501 = vunpack.c.l.b16 %v415
    %v502 = vunpack.c.h.b16 %v415
    %v503 = vunpack.c.l.b16 %v416
    %v504 = vunpack.c.h.b16 %v416
    %v505 = vunpack.c.l.b16 %v417
    %v506 = vunpack.c.h.b16 %v417
    %v507 = vunpack.c.l.b16 %v418
    %v508 = vunpack.c.h.b16 %v418
    %v509 = vunpack.c.l.b16 %v419
    %v510 = vunpack.c.h.b16 %v419
    %v511 = vunpack.c.l.b16 %v420
    %v512 = vunpack.c.h.b16 %v420
    %v513 = vunpack.c.l.b16 %v421
    %v514 = vunpack.c.h.b16 %v421
    %v515 = vunpack.c.l.b16 %v422
    %v516 = vunpack.c.h.b16 %v422
    %v517 = vunpack.c.l.b16 %v423
    %v518 = vunpack.c.h.b16 %v423
    %v519 = vunpack.c.l.b16 %v424
    %v520 = vunpack.c.h.b16 %v424
    %v521 = vunpack.c.l.b16 %v425
    %v522 = vunpack.c.h.b16 %v425
    %v523 = vunpack.c.l.b16 %v426
    %v524 = vunpack.c.h.b16 %v426
    %v525 = vunpack.c.l.b16 %v427
    %v526 = vunpack.c.h.b16 %v427
    %v527 = vunpack.c.l.b16 %v428
    %v528 = vunpack.c.h.b16 %v428
    %v529 = vunpack.c.l.b16 %v429
    %v530 = vunpack.c.h.b16 %v429
    %v531 = vunpack.c.l.b16 %v430
    %v532 = vunpack.c.h.b16 %v430
    %v533 = vunpack.c.l.b16 %v431
    %v534 = vunpack.c.h.b16 %v431
    %v535 = vunpack.c.l.b16 %v432
    %v536 = vunpack.c.h.b16 %v432
    %v537 = vunpack.c.l.b16 %v433
    %v538 = vunpack.c.h.b16 %v433
    %v539 = vunpack.c.l.b16 %v434
    %v540 = vunpack.c.h.b16 %v434
    %v541 = vunpack.c.l.b16 %v435
    %v542 = vunpack.c.h.b16 %v435
    %v543 = vunpack.c.l.b16 %v436
    %v544 = vunpack.c.h.b16 %v436
    %v545 = vunpack.c.l.b16 %v437
    %v546 = vunpack.c.h.b16 %v437
    %v547 = vunpack.c.l.b16 %v438
    %v548 = vunpack.c.h.b16 %v438
    %v549 = vunpack.c.l.b16 %v439
    %v550 = vunpack.c.h.b16 %v439
    %v551 = vpack.c.b16 %v489, %v487
    %v552 = vpack.c.b16 %v490, %v488
    %v553 = vpack.c.b16 %v493, %v491
    %v554 = vpack.c.b16 %v494, %v492
    %v555 = vpack.c.b16 %v497, %v495
    %v556 = vpack.c.b16 %v498, %v496
    %v557 = vpack.c.b16 %v501, %v499
    %v558 = vpack.c.b16 %v502, %v500
    %v559 = vpack.c.b16 %v505, %v503
    %v560 = vpack.c.b16 %v506, %v504
    %v561 = vpack.c.b16 %v509, %v507
    %v562 = vpack.c.b16 %v510, %v508
    %v563 = vpack.c.b16 %v513, %v511
    %v564 = vpack.c.b16 %v514, %v512
    %v565 = vpack.c.b16 %v517, %v515
    %v566 = vpack.c.b16 %v518, %v516
    %v567 = vpack.c.b16 %v521, %v519
    %v568 = vpack.c.b16 %v522, %v520
    %v569 = vpack.c.b16 %v525, %v523
    %v570 = vpack.c.b16 %v526, %v524
    %v571 = vpack.c.b16 %v529, %v527
    %v572 = vpack.c.b16 %v530, %v528
    %v573 = vpack.c.b16 %v533, %v531
    %v574 = vpack.c.b16 %v534, %v532
    %v575 = vpack.c.b16 %v537, %v535
    %v576 = vpack.c.b16 %v538, %v536
    %v577 = vpack.c.b16 %v541, %v539
    %v578 = vpack.c.b16 %v542, %v540
    %v579 = vpack.c.b16 %v545, %v543
    %v580 = vpack.c.b16 %v546, %v544
    %v581 = vpack.c.b16 %v549, %v547
    %v582 = vpack.c.b16 %v550, %v548
    %615 = vmatprep.subr.bf16.mxu0 %v566
    %616 = vmatpush1.bf16.msra.mxu0 %v565
    %617 = vmatprep.subr.bf16.mxu0 %v564
    %618 = vmatpush1.bf16.msra.mxu0 %v563
    %619 = vmatprep.subr.bf16.mxu0 %v562
    %620 = vmatpush1.bf16.msra.mxu0 %v561
    %621 = vmatprep.subr.bf16.mxu0 %v560
    %622 = vmatpush1.bf16.msra.mxu0 %v559
    %623 = vmatprep.subr.bf16.mxu0 %v558
    %624 = vmatpush1.bf16.msra.mxu0 %v557
    %625 = vmatprep.subr.bf16.mxu0 %v556
    %626 = vmatpush1.bf16.msra.mxu0 %v555
    %627 = vmatprep.subr.bf16.mxu0 %v554
    %628 = vmatpush1.bf16.msra.mxu0 %v553
    %629 = vmatprep.subr.bf16.mxu0 %v552
    %630 = vmatpush1.bf16.msra.mxu0 %v551
    %631 = vmatprep.subr.bf16.mxu0 %v582
    %632 = vmatpush2.bf16.msra.mxu0 %v581
    %633 = vmatprep.subr.bf16.mxu0 %v580
    %634 = vmatpush2.bf16.msra.mxu0 %v579
    %635 = vmatprep.subr.bf16.mxu0 %v578
    %636 = vmatpush2.bf16.msra.mxu0 %v577
    %637 = vmatprep.subr.bf16.mxu0 %v576
    %638 = vmatpush2.bf16.msra.mxu0 %v575
    %639 = vmatprep.subr.bf16.mxu0 %v574
    %640 = vmatpush2.bf16.msra.mxu0 %v573
    %641 = vmatprep.subr.bf16.mxu0 %v572
    %642 = vmatpush2.bf16.msra.mxu0 %v571
    %643 = vmatprep.subr.bf16.mxu0 %v570
    %644 = vmatpush2.bf16.msra.mxu0 %v569
    %645 = vmatprep.subr.bf16.mxu0 %v568
    %646 = vmatpush2.bf16.msra.mxu0 %v567
    %647 = vmatprep.mubr.bf16.mxu0 %v452
    %648 = vmatmul.mubr.bf16.gmra.mxu0 %v451
    %v649 = vpop.f32.mrf.mxu0
    %v650 = vadd.f32 0.0, %v649
    %v651 = vpop.f32.mrf.mxu0
    %v652 = vadd.f32 0.0, %v651
    %v653 = vpop.f32.mrf.mxu0
    %v654 = vpop.f32.mrf.mxu0
    %655 = vdwg.mxu0
    %v672 = vunpack.c.l.b16 %v212
    %v673 = vunpack.c.l.b16 %v213
    %v674 = vunpack.c.l.b16 %v214
    %v675 = vunpack.c.l.b16 %v215
    %v676 = vunpack.c.l.b16 %v216
    %v677 = vunpack.c.l.b16 %v217
    %v678 = vunpack.c.l.b16 %v218
    %v679 = vunpack.c.l.b16 %v219
    %v680 = vunpack.c.l.b16 %v220
    %v681 = vunpack.c.l.b16 %v221
    %v682 = vunpack.c.l.b16 %v222
    %v683 = vunpack.c.l.b16 %v223
    %v684 = vunpack.c.l.b16 %v224
    %v685 = vunpack.c.l.b16 %v225
    %v686 = vunpack.c.l.b16 %v226
    %v687 = vunpack.c.l.b16 %v227
    %v688 = vsel %vm448, %v680, %v672
    %v689 = vsel %vm448, %v681, %v673
    %v690 = vsel %vm448, %v682, %v674
    %v691 = vsel %vm448, %v683, %v675
    %v692 = vsel %vm448, %v684, %v676
    %v693 = vsel %vm448, %v685, %v677
    %v694 = vsel %vm448, %v686, %v678
    %v695 = vsel %vm448, %v687, %v679
    %v696 = vpack.c.b16 %v688, %v688
    %v697 = vpack.c.b16 %v689, %v689
    %v698 = vpack.c.b16 %v690, %v690
    %v699 = vpack.c.b16 %v691, %v691
    %v700 = vpack.c.b16 %v692, %v692
    %v701 = vpack.c.b16 %v693, %v693
    %v702 = vpack.c.b16 %v694, %v694
    %v703 = vpack.c.b16 %v695, %v695
    %v840 = vunpack.c.l.b16 %v280
    %v841 = vunpack.c.h.b16 %v280
    %v842 = vunpack.c.l.b16 %v281
    %v843 = vunpack.c.h.b16 %v281
    %v844 = vunpack.c.l.b16 %v282
    %v845 = vunpack.c.h.b16 %v282
    %v846 = vunpack.c.l.b16 %v283
    %v847 = vunpack.c.h.b16 %v283
    %v848 = vunpack.c.l.b16 %v284
    %v849 = vunpack.c.h.b16 %v284
    %v850 = vunpack.c.l.b16 %v285
    %v851 = vunpack.c.h.b16 %v285
    %v852 = vunpack.c.l.b16 %v286
    %v853 = vunpack.c.h.b16 %v286
    %v854 = vunpack.c.l.b16 %v287
    %v855 = vunpack.c.h.b16 %v287
    %v856 = vunpack.c.l.b16 %v288
    %v857 = vunpack.c.h.b16 %v288
    %v858 = vunpack.c.l.b16 %v289
    %v859 = vunpack.c.h.b16 %v289
    %v860 = vunpack.c.l.b16 %v290
    %v861 = vunpack.c.h.b16 %v290
    %v862 = vunpack.c.l.b16 %v291
    %v863 = vunpack.c.h.b16 %v291
    %v864 = vunpack.c.l.b16 %v292
    %v865 = vunpack.c.h.b16 %v292
    %v866 = vunpack.c.l.b16 %v293
    %v867 = vunpack.c.h.b16 %v293
    %v868 = vunpack.c.l.b16 %v294
    %v869 = vunpack.c.h.b16 %v294
    %v870 = vunpack.c.l.b16 %v295
    %v871 = vunpack.c.h.b16 %v295
    %v872 = vunpack.c.l.b16 %v296
    %v873 = vunpack.c.h.b16 %v296
    %v874 = vunpack.c.l.b16 %v297
    %v875 = vunpack.c.h.b16 %v297
    %v876 = vunpack.c.l.b16 %v298
    %v877 = vunpack.c.h.b16 %v298
    %v878 = vunpack.c.l.b16 %v299
    %v879 = vunpack.c.h.b16 %v299
    %v880 = vunpack.c.l.b16 %v300
    %v881 = vunpack.c.h.b16 %v300
    %v882 = vunpack.c.l.b16 %v301
    %v883 = vunpack.c.h.b16 %v301
    %v884 = vunpack.c.l.b16 %v302
    %v885 = vunpack.c.h.b16 %v302
    %v886 = vunpack.c.l.b16 %v303
    %v887 = vunpack.c.h.b16 %v303
    %v888 = vunpack.c.l.b16 %v304
    %v889 = vunpack.c.h.b16 %v304
    %v890 = vunpack.c.l.b16 %v305
    %v891 = vunpack.c.h.b16 %v305
    %v892 = vunpack.c.l.b16 %v306
    %v893 = vunpack.c.h.b16 %v306
    %v894 = vunpack.c.l.b16 %v307
    %v895 = vunpack.c.h.b16 %v307
    %v896 = vunpack.c.l.b16 %v308
    %v897 = vunpack.c.h.b16 %v308
    %v898 = vunpack.c.l.b16 %v309
    %v899 = vunpack.c.h.b16 %v309
    %v900 = vunpack.c.l.b16 %v310
    %v901 = vunpack.c.h.b16 %v310
    %v902 = vunpack.c.l.b16 %v311
    %v903 = vunpack.c.h.b16 %v311
    %v904 = vunpack.c.l.b16 %v312
    %v905 = vunpack.c.h.b16 %v312
    %v906 = vunpack.c.l.b16 %v313
    %v907 = vunpack.c.h.b16 %v313
    %v908 = vunpack.c.l.b16 %v314
    %v909 = vunpack.c.h.b16 %v314
    %v910 = vunpack.c.l.b16 %v315
    %v911 = vunpack.c.h.b16 %v315
    %v912 = vunpack.c.l.b16 %v316
    %v913 = vunpack.c.h.b16 %v316
    %v914 = vunpack.c.l.b16 %v317
    %v915 = vunpack.c.h.b16 %v317
    %v916 = vunpack.c.l.b16 %v318
    %v917 = vunpack.c.h.b16 %v318
    %v918 = vunpack.c.l.b16 %v319
    %v919 = vunpack.c.h.b16 %v319
    %v920 = vunpack.c.l.b16 %v320
    %v921 = vunpack.c.h.b16 %v320
    %v922 = vunpack.c.l.b16 %v321
    %v923 = vunpack.c.h.b16 %v321
    %v924 = vunpack.c.l.b16 %v322
    %v925 = vunpack.c.h.b16 %v322
    %v926 = vunpack.c.l.b16 %v323
    %v927 = vunpack.c.h.b16 %v323
    %v928 = vunpack.c.l.b16 %v324
    %v929 = vunpack.c.h.b16 %v324
    %v930 = vunpack.c.l.b16 %v325
    %v931 = vunpack.c.h.b16 %v325
    %v932 = vunpack.c.l.b16 %v326
    %v933 = vunpack.c.h.b16 %v326
    %v934 = vunpack.c.l.b16 %v327
    %v935 = vunpack.c.h.b16 %v327
    %v936 = vunpack.c.l.b16 %v328
    %v937 = vunpack.c.h.b16 %v328
    %v938 = vunpack.c.l.b16 %v329
    %v939 = vunpack.c.h.b16 %v329
    %v940 = vunpack.c.l.b16 %v330
    %v941 = vunpack.c.h.b16 %v330
    %v942 = vunpack.c.l.b16 %v331
    %v943 = vunpack.c.h.b16 %v331
    %v944 = vunpack.c.l.b16 %v332
    %v945 = vunpack.c.h.b16 %v332
    %v946 = vunpack.c.l.b16 %v333
    %v947 = vunpack.c.h.b16 %v333
    %v948 = vunpack.c.l.b16 %v334
    %v949 = vunpack.c.h.b16 %v334
    %v950 = vunpack.c.l.b16 %v335
    %v951 = vunpack.c.h.b16 %v335
    %v952 = vunpack.c.l.b16 %v336
    %v953 = vunpack.c.h.b16 %v336
    %v954 = vunpack.c.l.b16 %v337
    %v955 = vunpack.c.h.b16 %v337
    %v956 = vunpack.c.l.b16 %v338
    %v957 = vunpack.c.h.b16 %v338
    %v958 = vunpack.c.l.b16 %v339
    %v959 = vunpack.c.h.b16 %v339
    %v960 = vunpack.c.l.b16 %v340
    %v961 = vunpack.c.h.b16 %v340
    %v962 = vunpack.c.l.b16 %v341
    %v963 = vunpack.c.h.b16 %v341
    %v964 = vunpack.c.l.b16 %v342
    %v965 = vunpack.c.h.b16 %v342
    %v966 = vunpack.c.l.b16 %v343
    %v967 = vunpack.c.h.b16 %v343
    %v968 = vunpack.c.l.b16 %v344
    %v969 = vunpack.c.h.b16 %v344
    %v970 = vunpack.c.l.b16 %v345
    %v971 = vunpack.c.h.b16 %v345
    %v972 = vunpack.c.l.b16 %v346
    %v973 = vunpack.c.h.b16 %v346
    %v974 = vunpack.c.l.b16 %v347
    %v975 = vunpack.c.h.b16 %v347
    %v976 = vunpack.c.l.b16 %v348
    %v977 = vunpack.c.h.b16 %v348
    %v978 = vunpack.c.l.b16 %v349
    %v979 = vunpack.c.h.b16 %v349
    %v980 = vunpack.c.l.b16 %v350
    %v981 = vunpack.c.h.b16 %v350
    %v982 = vunpack.c.l.b16 %v351
    %v983 = vunpack.c.h.b16 %v351
    %v984 = vunpack.c.l.b16 %v352
    %v985 = vunpack.c.h.b16 %v352
    %v986 = vunpack.c.l.b16 %v353
    %v987 = vunpack.c.h.b16 %v353
    %v988 = vunpack.c.l.b16 %v354
    %v989 = vunpack.c.h.b16 %v354
    %v990 = vunpack.c.l.b16 %v355
    %v991 = vunpack.c.h.b16 %v355
    %v992 = vunpack.c.l.b16 %v356
    %v993 = vunpack.c.h.b16 %v356
    %v994 = vunpack.c.l.b16 %v357
    %v995 = vunpack.c.h.b16 %v357
    %v996 = vunpack.c.l.b16 %v358
    %v997 = vunpack.c.h.b16 %v358
    %v998 = vunpack.c.l.b16 %v359
    %v999 = vunpack.c.h.b16 %v359
    %v1000 = vunpack.c.l.b16 %v360
    %v1001 = vunpack.c.h.b16 %v360
    %v1002 = vunpack.c.l.b16 %v361
    %v1003 = vunpack.c.h.b16 %v361
    %v1004 = vunpack.c.l.b16 %v362
    %v1005 = vunpack.c.h.b16 %v362
    %v1006 = vunpack.c.l.b16 %v363
    %v1007 = vunpack.c.h.b16 %v363
    %v1008 = vunpack.c.l.b16 %v364
    %v1009 = vunpack.c.h.b16 %v364
    %v1010 = vunpack.c.l.b16 %v365
    %v1011 = vunpack.c.h.b16 %v365
    %v1012 = vunpack.c.l.b16 %v366
    %v1013 = vunpack.c.h.b16 %v366
    %v1014 = vunpack.c.l.b16 %v367
    %v1015 = vunpack.c.h.b16 %v367
    %v1016 = vunpack.c.l.b16 %v368
    %v1017 = vunpack.c.h.b16 %v368
    %v1018 = vunpack.c.l.b16 %v369
    %v1019 = vunpack.c.h.b16 %v369
    %v1020 = vunpack.c.l.b16 %v370
    %v1021 = vunpack.c.h.b16 %v370
    %v1022 = vunpack.c.l.b16 %v371
    %v1023 = vunpack.c.h.b16 %v371
    %v1024 = vunpack.c.l.b16 %v372
    %v1025 = vunpack.c.h.b16 %v372
    %v1026 = vunpack.c.l.b16 %v373
    %v1027 = vunpack.c.h.b16 %v373
    %v1028 = vunpack.c.l.b16 %v374
    %v1029 = vunpack.c.h.b16 %v374
    %v1030 = vunpack.c.l.b16 %v375
    %v1031 = vunpack.c.h.b16 %v375
    %v1032 = vunpack.c.l.b16 %v376
    %v1033 = vunpack.c.h.b16 %v376
    %v1034 = vunpack.c.l.b16 %v377
    %v1035 = vunpack.c.h.b16 %v377
    %v1036 = vunpack.c.l.b16 %v378
    %v1037 = vunpack.c.h.b16 %v378
    %v1038 = vunpack.c.l.b16 %v379
    %v1039 = vunpack.c.h.b16 %v379
    %v1040 = vunpack.c.l.b16 %v380
    %v1041 = vunpack.c.h.b16 %v380
    %v1042 = vunpack.c.l.b16 %v381
    %v1043 = vunpack.c.h.b16 %v381
    %v1044 = vunpack.c.l.b16 %v382
    %v1045 = vunpack.c.h.b16 %v382
    %v1046 = vunpack.c.l.b16 %v383
    %v1047 = vunpack.c.h.b16 %v383
    %v1048 = vunpack.c.l.b16 %v384
    %v1049 = vunpack.c.h.b16 %v384
    %v1050 = vunpack.c.l.b16 %v385
    %v1051 = vunpack.c.h.b16 %v385
    %v1052 = vunpack.c.l.b16 %v386
    %v1053 = vunpack.c.h.b16 %v386
    %v1054 = vunpack.c.l.b16 %v387
    %v1055 = vunpack.c.h.b16 %v387
    %v1056 = vunpack.c.l.b16 %v388
    %v1057 = vunpack.c.h.b16 %v388
    %v1058 = vunpack.c.l.b16 %v389
    %v1059 = vunpack.c.h.b16 %v389
    %v1060 = vunpack.c.l.b16 %v390
    %v1061 = vunpack.c.h.b16 %v390
    %v1062 = vunpack.c.l.b16 %v391
    %v1063 = vunpack.c.h.b16 %v391
    %v1064 = vunpack.c.l.b16 %v392
    %v1065 = vunpack.c.h.b16 %v392
    %v1066 = vunpack.c.l.b16 %v393
    %v1067 = vunpack.c.h.b16 %v393
    %v1068 = vunpack.c.l.b16 %v394
    %v1069 = vunpack.c.h.b16 %v394
    %v1070 = vunpack.c.l.b16 %v395
    %v1071 = vunpack.c.h.b16 %v395
    %v1072 = vunpack.c.l.b16 %v396
    %v1073 = vunpack.c.h.b16 %v396
    %v1074 = vunpack.c.l.b16 %v397
    %v1075 = vunpack.c.h.b16 %v397
    %v1076 = vunpack.c.l.b16 %v398
    %v1077 = vunpack.c.h.b16 %v398
    %v1078 = vunpack.c.l.b16 %v399
    %v1079 = vunpack.c.h.b16 %v399
    %v1080 = vunpack.c.l.b16 %v400
    %v1081 = vunpack.c.h.b16 %v400
    %v1082 = vunpack.c.l.b16 %v401
    %v1083 = vunpack.c.h.b16 %v401
    %v1084 = vunpack.c.l.b16 %v402
    %v1085 = vunpack.c.h.b16 %v402
    %v1086 = vunpack.c.l.b16 %v403
    %v1087 = vunpack.c.h.b16 %v403
    %v1088 = vunpack.c.l.b16 %v404
    %v1089 = vunpack.c.h.b16 %v404
    %v1090 = vunpack.c.l.b16 %v405
    %v1091 = vunpack.c.h.b16 %v405
    %v1092 = vunpack.c.l.b16 %v406
    %v1093 = vunpack.c.h.b16 %v406
    %v1094 = vunpack.c.l.b16 %v407
    %v1095 = vunpack.c.h.b16 %v407
    %v1096 = vpack.c.b16 %v842, %v840
    %v1097 = vpack.c.b16 %v843, %v841
    %v1098 = vpack.c.b16 %v846, %v844
    %v1099 = vpack.c.b16 %v847, %v845
    %v1100 = vpack.c.b16 %v850, %v848
    %v1101 = vpack.c.b16 %v851, %v849
    %v1102 = vpack.c.b16 %v854, %v852
    %v1103 = vpack.c.b16 %v855, %v853
    %v1104 = vpack.c.b16 %v858, %v856
    %v1105 = vpack.c.b16 %v859, %v857
    %v1106 = vpack.c.b16 %v862, %v860
    %v1107 = vpack.c.b16 %v863, %v861
    %v1108 = vpack.c.b16 %v866, %v864
    %v1109 = vpack.c.b16 %v867, %v865
    %v1110 = vpack.c.b16 %v870, %v868
    %v1111 = vpack.c.b16 %v871, %v869
    %v1112 = vpack.c.b16 %v874, %v872
    %v1113 = vpack.c.b16 %v875, %v873
    %v1114 = vpack.c.b16 %v878, %v876
    %v1115 = vpack.c.b16 %v879, %v877
    %v1116 = vpack.c.b16 %v882, %v880
    %v1117 = vpack.c.b16 %v883, %v881
    %v1118 = vpack.c.b16 %v886, %v884
    %v1119 = vpack.c.b16 %v887, %v885
    %v1120 = vpack.c.b16 %v890, %v888
    %v1121 = vpack.c.b16 %v891, %v889
    %v1122 = vpack.c.b16 %v894, %v892
    %v1123 = vpack.c.b16 %v895, %v893
    %v1124 = vpack.c.b16 %v898, %v896
    %v1125 = vpack.c.b16 %v899, %v897
    %v1126 = vpack.c.b16 %v902, %v900
    %v1127 = vpack.c.b16 %v903, %v901
    %v1128 = vpack.c.b16 %v906, %v904
    %v1129 = vpack.c.b16 %v907, %v905
    %v1130 = vpack.c.b16 %v910, %v908
    %v1131 = vpack.c.b16 %v911, %v909
    %v1132 = vpack.c.b16 %v914, %v912
    %v1133 = vpack.c.b16 %v915, %v913
    %v1134 = vpack.c.b16 %v918, %v916
    %v1135 = vpack.c.b16 %v919, %v917
    %v1136 = vpack.c.b16 %v922, %v920
    %v1137 = vpack.c.b16 %v923, %v921
    %v1138 = vpack.c.b16 %v926, %v924
    %v1139 = vpack.c.b16 %v927, %v925
    %v1140 = vpack.c.b16 %v930, %v928
    %v1141 = vpack.c.b16 %v931, %v929
    %v1142 = vpack.c.b16 %v934, %v932
    %v1143 = vpack.c.b16 %v935, %v933
    %v1144 = vpack.c.b16 %v938, %v936
    %v1145 = vpack.c.b16 %v939, %v937
    %v1146 = vpack.c.b16 %v942, %v940
    %v1147 = vpack.c.b16 %v943, %v941
    %v1148 = vpack.c.b16 %v946, %v944
    %v1149 = vpack.c.b16 %v947, %v945
    %v1150 = vpack.c.b16 %v950, %v948
    %v1151 = vpack.c.b16 %v951, %v949
    %v1152 = vpack.c.b16 %v954, %v952
    %v1153 = vpack.c.b16 %v955, %v953
    %v1154 = vpack.c.b16 %v958, %v956
    %v1155 = vpack.c.b16 %v959, %v957
    %v1156 = vpack.c.b16 %v962, %v960
    %v1157 = vpack.c.b16 %v963, %v961
    %v1158 = vpack.c.b16 %v966, %v964
    %v1159 = vpack.c.b16 %v967, %v965
    %v1160 = vpack.c.b16 %v970, %v968
    %v1161 = vpack.c.b16 %v971, %v969
    %v1162 = vpack.c.b16 %v974, %v972
    %v1163 = vpack.c.b16 %v975, %v973
    %v1164 = vpack.c.b16 %v978, %v976
    %v1165 = vpack.c.b16 %v979, %v977
    %v1166 = vpack.c.b16 %v982, %v980
    %v1167 = vpack.c.b16 %v983, %v981
    %v1168 = vpack.c.b16 %v986, %v984
    %v1169 = vpack.c.b16 %v987, %v985
    %v1170 = vpack.c.b16 %v990, %v988
    %v1171 = vpack.c.b16 %v991, %v989
    %v1172 = vpack.c.b16 %v994, %v992
    %v1173 = vpack.c.b16 %v995, %v993
    %v1174 = vpack.c.b16 %v998, %v996
    %v1175 = vpack.c.b16 %v999, %v997
    %v1176 = vpack.c.b16 %v1002, %v1000
    %v1177 = vpack.c.b16 %v1003, %v1001
    %v1178 = vpack.c.b16 %v1006, %v1004
    %v1179 = vpack.c.b16 %v1007, %v1005
    %v1180 = vpack.c.b16 %v1010, %v1008
    %v1181 = vpack.c.b16 %v1011, %v1009
    %v1182 = vpack.c.b16 %v1014, %v1012
    %v1183 = vpack.c.b16 %v1015, %v1013
    %v1184 = vpack.c.b16 %v1018, %v1016
    %v1185 = vpack.c.b16 %v1019, %v1017
    %v1186 = vpack.c.b16 %v1022, %v1020
    %v1187 = vpack.c.b16 %v1023, %v1021
    %v1188 = vpack.c.b16 %v1026, %v1024
    %v1189 = vpack.c.b16 %v1027, %v1025
    %v1190 = vpack.c.b16 %v1030, %v1028
    %v1191 = vpack.c.b16 %v1031, %v1029
    %v1192 = vpack.c.b16 %v1034, %v1032
    %v1193 = vpack.c.b16 %v1035, %v1033
    %v1194 = vpack.c.b16 %v1038, %v1036
    %v1195 = vpack.c.b16 %v1039, %v1037
    %v1196 = vpack.c.b16 %v1042, %v1040
    %v1197 = vpack.c.b16 %v1043, %v1041
    %v1198 = vpack.c.b16 %v1046, %v1044
    %v1199 = vpack.c.b16 %v1047, %v1045
    %v1200 = vpack.c.b16 %v1050, %v1048
    %v1201 = vpack.c.b16 %v1051, %v1049
    %v1202 = vpack.c.b16 %v1054, %v1052
    %v1203 = vpack.c.b16 %v1055, %v1053
    %v1204 = vpack.c.b16 %v1058, %v1056
    %v1205 = vpack.c.b16 %v1059, %v1057
    %v1206 = vpack.c.b16 %v1062, %v1060
    %v1207 = vpack.c.b16 %v1063, %v1061
    %v1208 = vpack.c.b16 %v1066, %v1064
    %v1209 = vpack.c.b16 %v1067, %v1065
    %v1210 = vpack.c.b16 %v1070, %v1068
    %v1211 = vpack.c.b16 %v1071, %v1069
    %v1212 = vpack.c.b16 %v1074, %v1072
    %v1213 = vpack.c.b16 %v1075, %v1073
    %v1214 = vpack.c.b16 %v1078, %v1076
    %v1215 = vpack.c.b16 %v1079, %v1077
    %v1216 = vpack.c.b16 %v1082, %v1080
    %v1217 = vpack.c.b16 %v1083, %v1081
    %v1218 = vpack.c.b16 %v1086, %v1084
    %v1219 = vpack.c.b16 %v1087, %v1085
    %v1220 = vpack.c.b16 %v1090, %v1088
    %v1221 = vpack.c.b16 %v1091, %v1089
    %v1222 = vpack.c.b16 %v1094, %v1092
    %v1223 = vpack.c.b16 %v1095, %v1093
    %1352 = vmatprep.subr.bf16.mxu0 %v1111
    %1353 = vmatpush1.bf16.msra.mxu0 %v1110
    %1354 = vmatprep.subr.bf16.mxu0 %v1109
    %1355 = vmatpush1.bf16.msra.mxu0 %v1108
    %1356 = vmatprep.subr.bf16.mxu0 %v1107
    %1357 = vmatpush1.bf16.msra.mxu0 %v1106
    %1358 = vmatprep.subr.bf16.mxu0 %v1105
    %1359 = vmatpush1.bf16.msra.mxu0 %v1104
    %1360 = vmatprep.subr.bf16.mxu0 %v1103
    %1361 = vmatpush1.bf16.msra.mxu0 %v1102
    %1362 = vmatprep.subr.bf16.mxu0 %v1101
    %1363 = vmatpush1.bf16.msra.mxu0 %v1100
    %1364 = vmatprep.subr.bf16.mxu0 %v1099
    %1365 = vmatpush1.bf16.msra.mxu0 %v1098
    %1366 = vmatprep.subr.bf16.mxu0 %v1097
    %1367 = vmatpush1.bf16.msra.mxu0 %v1096
    %1368 = vmatprep.subr.bf16.mxu0 %v1127
    %1369 = vmatpush2.bf16.msra.mxu0 %v1126
    %1370 = vmatprep.subr.bf16.mxu0 %v1125
    %1371 = vmatpush2.bf16.msra.mxu0 %v1124
    %1372 = vmatprep.subr.bf16.mxu0 %v1123
    %1373 = vmatpush2.bf16.msra.mxu0 %v1122
    %1374 = vmatprep.subr.bf16.mxu0 %v1121
    %1375 = vmatpush2.bf16.msra.mxu0 %v1120
    %1376 = vmatprep.subr.bf16.mxu0 %v1119
    %1377 = vmatpush2.bf16.msra.mxu0 %v1118
    %1378 = vmatprep.subr.bf16.mxu0 %v1117
    %1379 = vmatpush2.bf16.msra.mxu0 %v1116
    %1380 = vmatprep.subr.bf16.mxu0 %v1115
    %1381 = vmatpush2.bf16.msra.mxu0 %v1114
    %1382 = vmatprep.subr.bf16.mxu0 %v1113
    %1383 = vmatpush2.bf16.msra.mxu0 %v1112
    %1384 = vmatprep.mubr.bf16.mxu0 %v697
    %1385 = vmatmul.mubr.bf16.gmra.mxu0 %v696
    %v1386 = vpop.f32.mrf.mxu0
    %v1387 = vadd.f32 %v650, %v1386
    %v1388 = vpop.f32.mrf.mxu0
    %v1389 = vadd.f32 %v652, %v1388
    %v1390 = vpop.f32.mrf.mxu0
    %v1391 = vpop.f32.mrf.mxu0
    %1392 = vdwg.mxu0
    %1393 = vmatprep.subr.bf16.mxu0 %v1143
    %1394 = vmatpush1.bf16.msra.mxu0 %v1142
    %1395 = vmatprep.subr.bf16.mxu0 %v1141
    %1396 = vmatpush1.bf16.msra.mxu0 %v1140
    %1397 = vmatprep.subr.bf16.mxu0 %v1139
    %1398 = vmatpush1.bf16.msra.mxu0 %v1138
    %1399 = vmatprep.subr.bf16.mxu0 %v1137
    %1400 = vmatpush1.bf16.msra.mxu0 %v1136
    %1401 = vmatprep.subr.bf16.mxu0 %v1135
    %1402 = vmatpush1.bf16.msra.mxu0 %v1134
    %1403 = vmatprep.subr.bf16.mxu0 %v1133
    %1404 = vmatpush1.bf16.msra.mxu0 %v1132
    %1405 = vmatprep.subr.bf16.mxu0 %v1131
    %1406 = vmatpush1.bf16.msra.mxu0 %v1130
    %1407 = vmatprep.subr.bf16.mxu0 %v1129
    %1408 = vmatpush1.bf16.msra.mxu0 %v1128
    %1409 = vmatprep.subr.bf16.mxu0 %v1159
    %1410 = vmatpush2.bf16.msra.mxu0 %v1158
    %1411 = vmatprep.subr.bf16.mxu0 %v1157
    %1412 = vmatpush2.bf16.msra.mxu0 %v1156
    %1413 = vmatprep.subr.bf16.mxu0 %v1155
    %1414 = vmatpush2.bf16.msra.mxu0 %v1154
    %1415 = vmatprep.subr.bf16.mxu0 %v1153
    %1416 = vmatpush2.bf16.msra.mxu0 %v1152
    %1417 = vmatprep.subr.bf16.mxu0 %v1151
    %1418 = vmatpush2.bf16.msra.mxu0 %v1150
    %1419 = vmatprep.subr.bf16.mxu0 %v1149
    %1420 = vmatpush2.bf16.msra.mxu0 %v1148
    %1421 = vmatprep.subr.bf16.mxu0 %v1147
    %1422 = vmatpush2.bf16.msra.mxu0 %v1146
    %1423 = vmatprep.subr.bf16.mxu0 %v1145
    %1424 = vmatpush2.bf16.msra.mxu0 %v1144
    %1425 = vmatprep.mubr.bf16.mxu0 %v699
    %1426 = vmatmul.mubr.bf16.gmra.mxu0 %v698
    %v1427 = vpop.f32.mrf.mxu0
    %v1428 = vadd.f32 %v1387, %v1427
    %v1429 = vpop.f32.mrf.mxu0
    %v1430 = vadd.f32 %v1389, %v1429
    %v1431 = vpop.f32.mrf.mxu0
    %v1432 = vpop.f32.mrf.mxu0
    %1433 = vdwg.mxu0
    %1434 = vmatprep.subr.bf16.mxu0 %v1175
    %1435 = vmatpush1.bf16.msra.mxu0 %v1174
    %1436 = vmatprep.subr.bf16.mxu0 %v1173
    %1437 = vmatpush1.bf16.msra.mxu0 %v1172
    %1438 = vmatprep.subr.bf16.mxu0 %v1171
    %1439 = vmatpush1.bf16.msra.mxu0 %v1170
    %1440 = vmatprep.subr.bf16.mxu0 %v1169
    %1441 = vmatpush1.bf16.msra.mxu0 %v1168
    %1442 = vmatprep.subr.bf16.mxu0 %v1167
    %1443 = vmatpush1.bf16.msra.mxu0 %v1166
    %1444 = vmatprep.subr.bf16.mxu0 %v1165
    %1445 = vmatpush1.bf16.msra.mxu0 %v1164
    %1446 = vmatprep.subr.bf16.mxu0 %v1163
    %1447 = vmatpush1.bf16.msra.mxu0 %v1162
    %1448 = vmatprep.subr.bf16.mxu0 %v1161
    %1449 = vmatpush1.bf16.msra.mxu0 %v1160
    %1450 = vmatprep.subr.bf16.mxu0 %v1191
    %1451 = vmatpush2.bf16.msra.mxu0 %v1190
    %1452 = vmatprep.subr.bf16.mxu0 %v1189
    %1453 = vmatpush2.bf16.msra.mxu0 %v1188
    %1454 = vmatprep.subr.bf16.mxu0 %v1187
    %1455 = vmatpush2.bf16.msra.mxu0 %v1186
    %1456 = vmatprep.subr.bf16.mxu0 %v1185
    %1457 = vmatpush2.bf16.msra.mxu0 %v1184
    %1458 = vmatprep.subr.bf16.mxu0 %v1183
    %1459 = vmatpush2.bf16.msra.mxu0 %v1182
    %1460 = vmatprep.subr.bf16.mxu0 %v1181
    %1461 = vmatpush2.bf16.msra.mxu0 %v1180
    %1462 = vmatprep.subr.bf16.mxu0 %v1179
    %1463 = vmatpush2.bf16.msra.mxu0 %v1178
    %1464 = vmatprep.subr.bf16.mxu0 %v1177
    %1465 = vmatpush2.bf16.msra.mxu0 %v1176
    %1466 = vmatprep.mubr.bf16.mxu0 %v701
    %1467 = vmatmul.mubr.bf16.gmra.mxu0 %v700
    %v1468 = vpop.f32.mrf.mxu0
    %v1469 = vadd.f32 %v1428, %v1468
    %v1470 = vpop.f32.mrf.mxu0
    %v1471 = vadd.f32 %v1430, %v1470
    %v1472 = vpop.f32.mrf.mxu0
    %v1473 = vpop.f32.mrf.mxu0
    %1474 = vdwg.mxu0
    %1475 = vmatprep.subr.bf16.mxu0 %v1207
    %1476 = vmatpush1.bf16.msra.mxu0 %v1206
    %1477 = vmatprep.subr.bf16.mxu0 %v1205
    %1478 = vmatpush1.bf16.msra.mxu0 %v1204
    %1479 = vmatprep.subr.bf16.mxu0 %v1203
    %1480 = vmatpush1.bf16.msra.mxu0 %v1202
    %1481 = vmatprep.subr.bf16.mxu0 %v1201
    %1482 = vmatpush1.bf16.msra.mxu0 %v1200
    %1483 = vmatprep.subr.bf16.mxu0 %v1199
    %1484 = vmatpush1.bf16.msra.mxu0 %v1198
    %1485 = vmatprep.subr.bf16.mxu0 %v1197
    %1486 = vmatpush1.bf16.msra.mxu0 %v1196
    %1487 = vmatprep.subr.bf16.mxu0 %v1195
    %1488 = vmatpush1.bf16.msra.mxu0 %v1194
    %1489 = vmatprep.subr.bf16.mxu0 %v1193
    %1490 = vmatpush1.bf16.msra.mxu0 %v1192
    %1491 = vmatprep.subr.bf16.mxu0 %v1223
    %1492 = vmatpush2.bf16.msra.mxu0 %v1222
    %1493 = vmatprep.subr.bf16.mxu0 %v1221
    %1494 = vmatpush2.bf16.msra.mxu0 %v1220
    %1495 = vmatprep.subr.bf16.mxu0 %v1219
    %1496 = vmatpush2.bf16.msra.mxu0 %v1218
    %1497 = vmatprep.subr.bf16.mxu0 %v1217
    %1498 = vmatpush2.bf16.msra.mxu0 %v1216
    %1499 = vmatprep.subr.bf16.mxu0 %v1215
    %1500 = vmatpush2.bf16.msra.mxu0 %v1214
    %1501 = vmatprep.subr.bf16.mxu0 %v1213
    %1502 = vmatpush2.bf16.msra.mxu0 %v1212
    %1503 = vmatprep.subr.bf16.mxu0 %v1211
    %1504 = vmatpush2.bf16.msra.mxu0 %v1210
    %1505 = vmatprep.subr.bf16.mxu0 %v1209
    %1506 = vmatpush2.bf16.msra.mxu0 %v1208
    %1507 = vmatprep.mubr.bf16.mxu0 %v703
    %1508 = vmatmul.mubr.bf16.gmra.mxu0 %v702
    %v1509 = vpop.f32.mrf.mxu0
    %v1510 = vadd.f32 %v1469, %v1509
    %v1511 = vpop.f32.mrf.mxu0
    %v1512 = vadd.f32 %v1471, %v1511
    %v1513 = vpop.f32.mrf.mxu0
    %v1514 = vpop.f32.mrf.mxu0
    %1515 = vdwg.mxu0
    %v1516 = vld [vmem:[%s4] sm:$0x3]
    %v1518 = vlaneseq
    %v1519 = vshrl.u32 %v1518, 7
    %v1520 = vsub.s32 0, %v1519
    %v1521 = vrot.slane %v1516, %v1520
    %v1522 = vlaneseq
    %v1523 = vshrl.u32 %v1522, 7
    %v1524 = vsub.s32 1, %v1523
    %v1525 = vrot.slane %v1516, %v1524
    %v1528 = vadd.f32 %v1510, %v1521
    %v1529 = vadd.f32 %v1512, %v1525
    %v1530 = vmul.f32 %v1528, 0.5
    %v1531 = vmul.f32 %v1529, 0.5
    %v1532 = vmul.f32 %v1528, 0.70710677
    %v1533 = vmul.f32 %v1529, 0.70710677
    %v1534 = verf.f32.pop %v1532
    %v1535 = verf.f32.pop %v1533
    %v1536 = vadd.f32 %v1534, 1.0
    %v1537 = vadd.f32 %v1535, 1.0
    %v1538 = vmul.f32 %v1530, %v1536
    %v1539 = vmul.f32 %v1531, %v1537
    %v1540 = vld [vmem:[#allocation6] sm:$0xff]
    %v1541 = vld [vmem:[#allocation6 + $0x8] sm:$0xff]
    %v1542 = vld [vmem:[#allocation6 + $0x10] sm:$0xff]
    %v1543 = vld [vmem:[#allocation6 + $0x18] sm:$0xff]
    %v1544 = vld [vmem:[#allocation6 + $0x20] sm:$0xff]
    %v1545 = vld [vmem:[#allocation6 + $0x28] sm:$0xff]
    %v1546 = vld [vmem:[#allocation6 + $0x30] sm:$0xff]
    %v1547 = vld [vmem:[#allocation6 + $0x38] sm:$0xff]
    %v1548 = vld [vmem:[#allocation6 + $0x40] sm:$0xff]
    %v1549 = vld [vmem:[#allocation6 + $0x48] sm:$0xff]
    %v1550 = vld [vmem:[#allocation6 + $0x50] sm:$0xff]
    %v1551 = vld [vmem:[#allocation6 + $0x58] sm:$0xff]
    %v1552 = vld [vmem:[#allocation6 + $0x60] sm:$0xff]
    %v1553 = vld [vmem:[#allocation6 + $0x68] sm:$0xff]
    %v1554 = vld [vmem:[#allocation6 + $0x70] sm:$0xff]
    %v1555 = vld [vmem:[#allocation6 + $0x78] sm:$0xff]
    %v1556 = vld [vmem:[#allocation6 + $0x80] sm:$0xff]
    %v1557 = vld [vmem:[#allocation6 + $0x88] sm:$0xff]
    %v1558 = vld [vmem:[#allocation6 + $0x90] sm:$0xff]
    %v1559 = vld [vmem:[#allocation6 + $0x98] sm:$0xff]
    %v1560 = vld [vmem:[#allocation6 + $0xa0] sm:$0xff]
    %v1561 = vld [vmem:[#allocation6 + $0xa8] sm:$0xff]
    %v1562 = vld [vmem:[#allocation6 + $0xb0] sm:$0xff]
    %v1563 = vld [vmem:[#allocation6 + $0xb8] sm:$0xff]
    %v1564 = vld [vmem:[#allocation6 + $0xc0] sm:$0xff]
    %v1565 = vld [vmem:[#allocation6 + $0xc8] sm:$0xff]
    %v1566 = vld [vmem:[#allocation6 + $0xd0] sm:$0xff]
    %v1567 = vld [vmem:[#allocation6 + $0xd8] sm:$0xff]
    %v1568 = vld [vmem:[#allocation6 + $0xe0] sm:$0xff]
    %v1569 = vld [vmem:[#allocation6 + $0xe8] sm:$0xff]
    %v1570 = vld [vmem:[#allocation6 + $0xf0] sm:$0xff]
    %v1571 = vld [vmem:[#allocation6 + $0xf8] sm:$0xff]
    %v1572 = vld [vmem:[%s6] sm:$0x1]
    %v1574 = vlaneseq
    %v1575 = vshrl.u32 %v1574, 7
    %v1576 = vsub.s32 0, %v1575
    %v1577 = vrot.slane %v1572, %v1576
    %1579 = vmatprep.subr.mxu0 0.0
    %1580 = vmatpush1.msra.mxu0 %v1555
    %1581 = vmatprep.subr.mxu0 0.0
    %1582 = vmatpush1.msra.mxu0 %v1554
    %1583 = vmatprep.subr.mxu0 0.0
    %1584 = vmatpush1.msra.mxu0 %v1553
    %1585 = vmatprep.subr.mxu0 0.0
    %1586 = vmatpush1.msra.mxu0 %v1552
    %1587 = vmatprep.subr.mxu0 0.0
    %1588 = vmatpush1.msra.mxu0 %v1551
    %1589 = vmatprep.subr.mxu0 0.0
    %1590 = vmatpush1.msra.mxu0 %v1550
    %1591 = vmatprep.subr.mxu0 0.0
    %1592 = vmatpush1.msra.mxu0 %v1549
    %1593 = vmatprep.subr.mxu0 0.0
    %1594 = vmatpush1.msra.mxu0 %v1548
    %1595 = vmatprep.subr.mxu0 0.0
    %1596 = vmatpush1.msra.mxu0 %v1547
    %1597 = vmatprep.subr.mxu0 0.0
    %1598 = vmatpush1.msra.mxu0 %v1546
    %1599 = vmatprep.subr.mxu0 0.0
    %1600 = vmatpush1.msra.mxu0 %v1545
    %1601 = vmatprep.subr.mxu0 0.0
    %1602 = vmatpush1.msra.mxu0 %v1544
    %1603 = vmatprep.subr.mxu0 0.0
    %1604 = vmatpush1.msra.mxu0 %v1543
    %1605 = vmatprep.subr.mxu0 0.0
    %1606 = vmatpush1.msra.mxu0 %v1542
    %1607 = vmatprep.subr.mxu0 0.0
    %1608 = vmatpush1.msra.mxu0 %v1541
    %1609 = vmatprep.subr.mxu0 0.0
    %1610 = vmatpush1.msra.mxu0 %v1540
    %1611 = vmatprep.subr.mxu0 0.0
    %1612 = vmatpush2.msra.mxu0 %v1571
    %1613 = vmatprep.subr.mxu0 0.0
    %1614 = vmatpush2.msra.mxu0 %v1570
    %1615 = vmatprep.subr.mxu0 0.0
    %1616 = vmatpush2.msra.mxu0 %v1569
    %1617 = vmatprep.subr.mxu0 0.0
    %1618 = vmatpush2.msra.mxu0 %v1568
    %1619 = vmatprep.subr.mxu0 0.0
    %1620 = vmatpush2.msra.mxu0 %v1567
    %1621 = vmatprep.subr.mxu0 0.0
    %1622 = vmatpush2.msra.mxu0 %v1566
    %1623 = vmatprep.subr.mxu0 0.0
    %1624 = vmatpush2.msra.mxu0 %v1565
    %1625 = vmatprep.subr.mxu0 0.0
    %1626 = vmatpush2.msra.mxu0 %v1564
    %1627 = vmatprep.subr.mxu0 0.0
    %1628 = vmatpush2.msra.mxu0 %v1563
    %1629 = vmatprep.subr.mxu0 0.0
    %1630 = vmatpush2.msra.mxu0 %v1562
    %1631 = vmatprep.subr.mxu0 0.0
    %1632 = vmatpush2.msra.mxu0 %v1561
    %1633 = vmatprep.subr.mxu0 0.0
    %1634 = vmatpush2.msra.mxu0 %v1560
    %1635 = vmatprep.subr.mxu0 0.0
    %1636 = vmatpush2.msra.mxu0 %v1559
    %1637 = vmatprep.subr.mxu0 0.0
    %1638 = vmatpush2.msra.mxu0 %v1558
    %1639 = vmatprep.subr.mxu0 0.0
    %1640 = vmatpush2.msra.mxu0 %v1557
    %1641 = vmatprep.subr.mxu0 0.0
    %1642 = vmatpush2.msra.mxu0 %v1556
    %1643 = vmatprep.mubr.f32.mxu0 %v1539
    %1644 = vmatmul.mubr.f32.gmra.mxu0 %v1538
    %v1645 = vpop.f32.mrf.mxu0
    %v1646 = vadd.f32 %v1577, %v1645
    %v1647 = vpop.f32.mrf.mxu0
    %1648 = vdwg.mxu0
    %v1651 = vunpack.c.l.s4 1966171168
    %v1652 = vunpack.c.0.s8 %v1651
    %v1653 = vlaneseq
    %v1654 = vshrl.u32 %v1653, 7
    %v1655 = vsub.s32 %v1652, %v1654
    %v1656 = vrot.slane %v1646, %v1655
    %v1657 = vcombine.high %v1656, %v1656
    %v1659 = vunpack.c.l.s4 1966171168
    %v1660 = vunpack.c.0.s8 %v1659
    %v1661 = vlaneseq
    %v1662 = vshrl.u32 %v1661, 7
    %v1663 = vsub.s32 %v1660, %v1662
    %v1664 = vrot.slane %v1656, %v1663
    %v1666 = vunpack.c.l.s4 1966171168
    %v1667 = vunpack.c.0.s8 %v1666
    %v1668 = vlaneseq
    %v1669 = vshrl.u32 %v1668, 7
    %v1670 = vsub.s32 %v1667, %v1669
    %v1671 = vrot.slane %v1657, %v1670
    %v1672 = vlaneseq
    %v1673 = vshrl.u32 %v1672, 7
    %v1674 = vsub.s32 0, %v1673
    %v1675 = vrot.slane %v1664, %v1674
    %v1676 = vlaneseq
    %v1677 = vshrl.u32 %v1676, 7
    %v1678 = vsub.s32 0, %v1677
    %v1679 = vrot.slane %v1671, %v1678
    %1682 = vst [vmem:[%s7] sm:$0xff] %v1675
    %1683 = vst [vmem:[%s7 + $0x8] sm:$0xff] %v1675
    %1684 = vst [vmem:[%s7 + $0x10] sm:$0xf] %v1675
    %1685 = vst [vmem:[%s7 + $0x18] sm:$0xff] %v1679
    %1686 = vst [vmem:[%s7 + $0x20] sm:$0xff] %v1679
    %1687 = vst [vmem:[%s7 + $0x28] sm:$0xf] %v1679
    // Predicated region
    $region42: #{tpu_custom_call.1} parent=1 // pred_check
      _
    $region43: #{tpu_custom_call.1} parent=1 // pred_check_branch
      %1689 = sbr.rel (0) target = $region45
    $region44: #{tpu_custom_call.1} parent=1 // pred_region
      _
    $region45: #{tpu_custom_call.1} parent=1 // pred_fallthru
      _
    // Predicated region
    $region46: #{tpu_custom_call.1} parent=1 // pred_check
      _
    $region47: #{tpu_custom_call.1} parent=1 // pred_check_branch
      %1691 = sbr.rel (0) target = $region49
    $region48: #{tpu_custom_call.1} parent=1 // pred_region
      _
    $region49: #{tpu_custom_call.1} parent=1 // pred_fallthru
      _
    %1692 = vsyncpa [#allocation3], 1
    %1693 = vsyncpa [#allocation5], 1

</llo_original>
